<compile_context>
chip_gen: v7x
topology: tpu7x:2x2x1
jax: 0.10.0
libtpu: 0.0.40
codegen_flags: <defaults>
</compile_context>

<pallas_src>
import jax
import jax.numpy as jnp
from jax.experimental import pallas as pl
from jax.experimental.pallas import tpu as pltpu

_SOFTPLUS_THRESHOLD = 20.0  # matches torch.nn.functional.softplus default
_MIB = 1024 * 1024
_COL_CANDIDATES = (4096, 2048, 1024, 512, 256, 128)


def _mish_kernel(x_ref, o_ref):
    x = x_ref[...].astype(jnp.float32)
    # tanh(softplus(x)) == (e^{2x} + 2e^x) / (e^{2x} + 2e^x + 2).
    # Clamp before exp so e^{2x} cannot overflow; for x > threshold the
    # softplus linear region gives tanh(...) == 1 in f32, i.e. mish(x) == x.
    t = jnp.exp(jnp.minimum(x, _SOFTPLUS_THRESHOLD))
    num = t * (t + 2.0)
    ratio = num * pl.reciprocal(num + 2.0, approx=False)
    y = jnp.where(x > _SOFTPLUS_THRESHOLD, x, x * ratio)
    o_ref[...] = y.astype(o_ref.dtype)


def _mish_math(x):
    """Same rewritten math as the kernel, for tiny (<128 elem) jnp-only tails."""
    x32 = x.astype(jnp.float32)
    t = jnp.exp(jnp.minimum(x32, _SOFTPLUS_THRESHOLD))
    num = t * (t + 2.0)
    y = jnp.where(x32 > _SOFTPLUS_THRESHOLD, x32, x32 * (num / (num + 2.0)))
    return y.astype(x.dtype)


def _vmem_budget():
    """Per-generation (block_bytes, vmem_limit_bytes)."""
    try:
        vmem_cap = int(pltpu.get_tpu_info().vmem_capacity_bytes)
    except Exception:
        vmem_cap = 64 * _MIB  # conservative fallback (v7x per-TC VMEM)
    if vmem_cap >= 128 * _MIB:
        # v5e / v6e: 8 MiB blocks -> 32 MiB pipelined (in+out, double-buffered).
        return 8 * _MIB, 64 * _MIB
    # v7x: keep the pipelined footprint ~24 MiB of the 64 MiB per-TC VMEM.
    return 6 * _MIB, 48 * _MIB


def _sublane_multiple(dtype) -> int:
    # Native sublane packing: 8 for f32, 16 for bf16/f16, 32 for int8/fp8.
    return max(8, 32 // jnp.dtype(dtype).itemsize)


def _pick_cols(n: int):
    for cand in _COL_CANDIDATES:
        if n % cand == 0:
            return cand
    return None


def _pick_tile_rows(rows: int, cols: int, sub: int, itemsize: int,
                    block_bytes: int) -> int:
    target_elems = max(sub * 128, block_bytes // itemsize)
    target_rows = max(sub, (target_elems // cols) // sub * sub)
    if rows <= sub:
        # Single (possibly partial-sublane) block; block == full array is legal.
        return rows
    # Split into >= 2 grid steps so both v7x TensorCores get work
    # (the "parallel" axis only shards when there are >= 2 steps).
    half_rows = ((rows + 1) // 2 + sub - 1) // sub * sub
    return max(sub, min(target_rows, half_rows))


def _mish_2d(x2d: jax.Array, tile_rows: int, vmem_limit_bytes: int) -> jax.Array:
    rows, cols = x2d.shape
    return pl.pallas_call(
        _mish_kernel,
        out_shape=jax.ShapeDtypeStruct((rows, cols), x2d.dtype),
        grid_spec=pltpu.PrefetchScalarGridSpec(
            num_scalar_prefetch=0,
            grid=(pl.cdiv(rows, tile_rows),),
            in_specs=[pl.BlockSpec((tile_rows, cols), lambda i: (i, 0))],
            out_specs=pl.BlockSpec((tile_rows, cols), lambda i: (i, 0)),
        ),
        compiler_params=pltpu.CompilerParams(
            dimension_semantics=("parallel",),
            vmem_limit_bytes=vmem_limit_bytes,
        ),
    )(x2d)


def mish(x: jax.Array) -> jax.Array:
    """Elementwise Mish, exact forward semantics of the PyTorch module."""
    orig_shape = x.shape
    n = x.size
    if n == 0:
        return x
    itemsize = jnp.dtype(x.dtype).itemsize
    sub = _sublane_multiple(x.dtype)
    block_bytes, vmem_limit = _vmem_budget()

    cols = _pick_cols(n)
    if cols is not None:
        # Common path: free contiguous reshape to a lane-dense slab, no padding.
        x2d = x.reshape(n // cols, cols)
        tile_rows = _pick_tile_rows(x2d.shape[0], cols, sub, itemsize, block_bytes)
        return _mish_2d(x2d, tile_rows, vmem_limit).reshape(orig_shape)

    # Ragged fallback: flat size not a multiple of 128. Kernel on the largest
    # 128-divisible prefix; the <128-element tail is computed with plain jnp.
    flat = x.reshape(-1)
    head = (n // 128) * 128
    tail_out = _mish_math(flat[head:])
    if head == 0:
        return tail_out.reshape(orig_shape)
    cols = _pick_cols(head)
    head2d = flat[:head].reshape(head // cols, cols)
    tile_rows = _pick_tile_rows(head2d.shape[0], cols, sub, itemsize, block_bytes)
    head_out = _mish_2d(head2d, tile_rows, vmem_limit).reshape(-1)
    return jnp.concatenate([head_out, tail_out]).reshape(orig_shape)


def mish_reference(x):
    x32 = x.astype(jnp.float32)
    return (x32 * jnp.tanh(jax.nn.softplus(x32))).astype(x.dtype)


# TODO(synk): only the forward pass is implemented; the custom autograd
# backward of Mish_func is not translated (no jax.custom_vjp wired up here).

if __name__ == "__main__":
    key = jax.random.PRNGKey(0)

    # Small NCHW activation map (ConvNet-MNIST style) -- common no-pad path.
    x = jax.random.normal(key, (2, 4, 16, 16), dtype=jnp.float32) * 3.0
    y = jax.block_until_ready(mish(x))
    assert y.shape == x.shape and y.dtype == x.dtype
    assert jnp.allclose(y, mish_reference(x), atol=1e-5, rtol=1e-5)

    # Multi-step grid: rows > sublane multiple, partial last block.
    x2 = jax.random.normal(jax.random.PRNGKey(1), (2, 17, 64), dtype=jnp.float32) * 3.0
    y2 = jax.block_until_ready(mish(x2))
    assert jnp.allclose(y2, mish_reference(x2), atol=1e-5, rtol=1e-5)

    # Ragged size (not a multiple of 128): Pallas prefix + jnp tail.
    x3 = jax.random.normal(jax.random.PRNGKey(2), (3, 5, 67), dtype=jnp.float32) * 3.0
    y3 = jax.block_until_ready(mish(x3))
    assert jnp.allclose(y3, mish_reference(x3), atol=1e-5, rtol=1e-5)

    # Tiny ragged size (< 128 elements): pure jnp path.
    x4 = jax.random.normal(jax.random.PRNGKey(3), (3, 5, 7), dtype=jnp.float32) * 3.0
    y4 = jax.block_until_ready(mish(x4))
    assert jnp.allclose(y4, mish_reference(x4), atol=1e-5, rtol=1e-5)

    print("KERNEL_OK")
</pallas_src>

<mosaic_0001>
module attributes {stable_mosaic.version = 11 : i64} {
  func.func @_mish_kernel(%arg0: i32, %arg1: memref<1x2048xf32, #tpu.memory_space<vmem>>, %arg2: memref<1x2048xf32, #tpu.memory_space<vmem>>) attributes {dimension_semantics = [#tpu.dimension_semantics<parallel>], iteration_bounds = array<i64: 1>, scalar_prefetch = 0 : i64, scratch_operands = 0 : i64, tpu.core_type = #tpu.core_type<tc>, window_params = [{transform_indices = @transform_0, window_bounds = array<i64: 1, 2048>}, {transform_indices = @transform_1, window_bounds = array<i64: 1, 2048>}]} {
    %c0 = arith.constant 0 : index
    %c0_0 = arith.constant 0 : index
    %0 = vector.load %arg1[%c0, %c0_0] : memref<1x2048xf32, #tpu.memory_space<vmem>>, vector<1x2048xf32>
    %cst = arith.constant 2.000000e+01 : f32
    %1 = vector.broadcast %cst : f32 to vector<1x2048xf32>
    %2 = arith.minimumf %0, %1 : vector<1x2048xf32>
    %3 = math.exp %2 : vector<1x2048xf32>
    %cst_1 = arith.constant 2.000000e+00 : f32
    %4 = vector.broadcast %cst_1 : f32 to vector<1x2048xf32>
    %5 = arith.addf %3, %4 : vector<1x2048xf32>
    %6 = arith.mulf %3, %5 : vector<1x2048xf32>
    %cst_2 = arith.constant 2.000000e+00 : f32
    %7 = vector.broadcast %cst_2 : f32 to vector<1x2048xf32>
    %8 = arith.addf %6, %7 : vector<1x2048xf32>
    %9 = tpu.reciprocal %8 : vector<1x2048xf32> -> vector<1x2048xf32>
    %10 = arith.mulf %6, %9 : vector<1x2048xf32>
    %cst_3 = arith.constant 2.000000e+01 : f32
    %11 = vector.broadcast %cst_3 : f32 to vector<1x2048xf32>
    %12 = arith.cmpf ogt, %0, %11 : vector<1x2048xf32>
    %13 = arith.mulf %0, %10 : vector<1x2048xf32>
    %14 = arith.select %12, %0, %13 : vector<1x2048xi1>, vector<1x2048xf32>
    %c0_4 = arith.constant 0 : index
    %c0_5 = arith.constant 0 : index
    %15 = vector.load %arg2[%c0_4, %c0_5] : memref<1x2048xf32, #tpu.memory_space<vmem>>, vector<1x2048xf32>
    tpu.vector_store %arg2[%c0_4, %c0_5], %14 {strides = array<i32>} : memref<1x2048xf32, #tpu.memory_space<vmem>>, vector<1x2048xf32>,
    return
  }
  func.func @transform_0(%arg0: i32) -> (i32, i32) {
    %c0_i32 = arith.constant 0 : i32
    %c0_i32_0 = arith.constant 0 : i32
    return %arg0, %c0_i32 : i32, i32
  }
  func.func @transform_1(%arg0: i32) -> (i32, i32) {
    %c0_i32 = arith.constant 0 : i32
    %c0_i32_0 = arith.constant 0 : i32
    return %arg0, %c0_i32 : i32, i32
  }
}

</mosaic_0001>

<llo_original>
// kernel: tpu_custom_call.1
$region0: #{tpu_custom_call.1}
  #allocation0 [shape = 'u32[]', space=smem, size = 0x4, offset = 0x4, fixed_abs, tag = 'smem constant byte address 0x4 - core index']
  #allocation1 [shape = 'u32[144,128]{1,0:T(1,128)}', space=vmem, size = 0x12000, scoped, tag = 'internal scratch']
  %s0 = inlined_call_operand.hbm [shape: f32[1,2048], index: 0, kind: input, shape index: {}]
  %s1 = inlined_call_operand.hbm [shape: f32[1,2048], index: 1, kind: output, shape index: {}]
  %s2 = sld [smem:[#allocation0]]
  $region18: #{tpu_custom_call.1} parent=0
    _
  %s4 = ssub.s32 1, %s2
  %s5 = scalar_select 0, %s4, %s2
  $region1: #{tpu_custom_call.1} parent=0
    #allocation2 [shape = 'u8[8192]{0}', space=vmem, size = 0x2000, scoped, tag = 'input window, operand 0, single buffered']
    #allocation3 [shape = 's32[1]{0}', space=sflag, size = 0x4, scoped, tag = 'scoped memory for tpu_custom_call.1']
    #allocation4 [shape = 's32[1]{0}', space=sflag, size = 0x4, scoped, tag = 'scoped memory for tpu_custom_call.1']
    #allocation5 [shape = 'u8[8192]{0}', space=vmem, size = 0x2000, scoped, tag = 'output window, operand 0, single buffered']
    %6 = vsyncpa [#allocation3], 0
    %7 = vsyncpa [#allocation4], 0
    // Predicated region
    $region2: #{tpu_custom_call.1} parent=1 // pred_check
      _
    $region3: #{tpu_custom_call.1} parent=1 // pred_check_branch
      %9 = sbr.rel (0) target = $region5
    $region4: #{tpu_custom_call.1} parent=1 // pred_region
      %s11 = ssub.s32 256, 256
      %12 = vsyncadd [#allocation3], %s11
      %s14 = sshll.u32 [#allocation2], 4
      %s15 = int_to_ptr.vmem [resolvable:$true] %s14
      %17 = dma.hbm_to_vmem [thread:$0]  %s0, 256, %s15, [#allocation3]
    $region5: #{tpu_custom_call.1} parent=1 // pred_fallthru
      _
    // Predicated region
    $region6: #{tpu_custom_call.1} parent=1 // pred_check
      _
    $region7: #{tpu_custom_call.1} parent=1 // pred_check_branch
      %19 = sbr.rel (0) target = $region9
    $region8: #{tpu_custom_call.1} parent=1 // pred_region
      %20 = dma.done [#allocation3], 256
    $region9: #{tpu_custom_call.1} parent=1 // pred_fallthru
      _
    %v21 = vld [vmem:[#allocation2] sm:$0xff]
    %v22 = vld [vmem:[#allocation2 + $0x8] sm:$0xff]
    %v23 = vmin.f32 %v21, 20.0
    %v24 = vmin.f32 %v22, 20.0
    %v25 = vmul.f32 %v23, 1.442695
    %v26 = vpow.pop %v25
    %v27 = vmul.f32 %v24, 1.442695
    %v28 = vpow.pop %v27
    %v29 = vadd.f32 %v26, 2.0
    %v30 = vadd.f32 %v28, 2.0
    %v31 = vmul.f32 %v26, %v29
    %v32 = vmul.f32 %v28, %v30
    %v33 = vadd.f32 %v31, 2.0
    %v34 = vadd.f32 %v32, 2.0
    %v35 = vrcp.pop %v33
    %v36 = vrcp.pop %v34
    %v37 = vmul.f32 %v31, %v35
    %v38 = vmul.f32 %v32, %v36
    %vm39 = vcmp.gt.f32.partialorder %v21, 20.0
    %vm40 = vcmp.gt.f32.partialorder %v22, 20.0
    %v41 = vmul.f32 %v21, %v37
    %v42 = vmul.f32 %v22, %v38
    %v43 = vsel %vm39, %v21, %v41
    %v44 = vsel %vm40, %v22, %v42
    %45 = vst [vmem:[#allocation5] sm:$0xff] %v43
    %46 = vst [vmem:[#allocation5 + $0x8] sm:$0xff] %v44
    // Predicated region
    $region10: #{tpu_custom_call.1} parent=1 // pred_check
      _
    $region11: #{tpu_custom_call.1} parent=1 // pred_check_branch
      %48 = sbr.rel (0) target = $region13
    $region12: #{tpu_custom_call.1} parent=1 // pred_region
      %s50 = ssub.s32 256, 256
      %51 = vsyncadd [#allocation4], %s50
      %s53 = sshll.u32 [#allocation5], 4
      %s54 = int_to_ptr.vmem [resolvable:$true] %s53
      %56 = dma.vmem_to_hbm [thread:$0]  %s54, 256, %s1, [#allocation4]
    $region13: #{tpu_custom_call.1} parent=1 // pred_fallthru
      _
    // Predicated region
    $region14: #{tpu_custom_call.1} parent=1 // pred_check
      _
    $region15: #{tpu_custom_call.1} parent=1 // pred_check_branch
      %58 = sbr.rel (0) target = $region17
    $region16: #{tpu_custom_call.1} parent=1 // pred_region
      %59 = dma.done [#allocation4], 256
    $region17: #{tpu_custom_call.1} parent=1 // pred_fallthru
      _
    %60 = vsyncpa [#allocation3], 1
    %61 = vsyncpa [#allocation4], 1

</llo_original>
